<compile_context>
chip_gen: v5e
topology: v5e:2x2
jax: 0.10.0
libtpu: 0.0.40
codegen_flags: <defaults>
</compile_context>

<pallas_src>
import jax
import jax.numpy as jnp
from jax.experimental import pallas as pl
from jax.experimental.pallas import tpu as pltpu

IN_DIM = 8       # real input features
HID = 128        # padded feature width (lane-dense)
N_LAYERS = 5
OUT_DIM = 13     # real number of classes
NEG_MASK = -1e30  # finite large-negative bias for padded logit columns


def net_kernel(x_ref, w1_ref, w_ref, b_ref, o_ref):
    """One batch tile through the 5-layer MLP + masked log_softmax.

    x_ref:  (TB, 8)        f32 input tile
    w1_ref: (8, 128)       bf16 fc1 weights (cols 32.. zero)
    w_ref:  (4, 128, 128)  bf16 fc2..fc5 weights (zero-padded)
    b_ref:  (8, 128)       f32 biases; row 4 carries the -1e30 class mask
    o_ref:  (TB, 128)      f32 log-probs (cols 13.. are ~-1e30, sliced by wrapper)
    """
    b_all = b_ref[...]                                   # (8, 128), loaded once

    # fc1: (TB,8) x (8,128) on the MXU in bf16, f32 accumulate.
    h = jnp.dot(x_ref[...].astype(jnp.bfloat16), w1_ref[...],
                preferred_element_type=jnp.float32)
    h = jnp.maximum(h + b_all[0:1, :], 0.0)

    # fc2..fc4 + ReLU (zero-padded weights/biases keep padded columns exactly 0).
    for layer in range(3):
        h = jnp.dot(h.astype(jnp.bfloat16), w_ref[layer],
                    preferred_element_type=jnp.float32)
        h = jnp.maximum(h + b_all[layer + 1:layer + 2, :], 0.0)

    # fc5 logits; padded columns pick up the folded -1e30 bias mask.
    logits = jnp.dot(h.astype(jnp.bfloat16), w_ref[3],
                     preferred_element_type=jnp.float32)
    logits = logits + b_all[4:5, :]

    # Exact log_softmax over the 13 real classes (padded cols contribute exp(-1e30)=0).
    m = jnp.max(logits, axis=1, keepdims=True)
    shifted = logits - m
    lse = jnp.log(jnp.sum(jnp.exp(shifted), axis=1, keepdims=True))
    o_ref[...] = shifted - lse


def _round_up(n, m):
    return (n + m - 1) // m * m


def net_forward(x, w1, w_rest, b_slab, *, block_batch=1024):
    """x: [B, 8] f32.  Returns log-probs [B, 13] f32."""
    B, f_in = x.shape
    assert f_in == IN_DIM

    B8 = _round_up(B, 8)
    TB = min(block_batch, B8)
    # Ensure >= 2 grid steps when the batch allows, so the "parallel" batch axis
    # can shard across both TensorCores on v7x (no-op cost on 1-TC chips).
    if B8 >= 16:
        TB = min(TB, max(8, (B8 // 2) // 8 * 8))
    B_pad = _round_up(B8, TB)
    grid = (B_pad // TB,)

    # Pad batch rows only; feature dim stays 8 (32 B/row input DMA, no extra HBM pass).
    x_pad = x if B_pad == B else jnp.zeros((B_pad, IN_DIM), x.dtype).at[:B].set(x)

    # Real (unpadded-K) work for the advisory cost estimate.
    flops = 2 * B_pad * (IN_DIM * 32 + 3 * 32 * 32 + 32 * OUT_DIM)
    bytes_accessed = (x_pad.size * 4 + B_pad * HID * 4      # input + output (f32)
                      + w1.size * 2 + w_rest.size * 2       # bf16 weights
                      + b_slab.size * 4)                    # f32 biases
    cost = pl.CostEstimate(flops=flops,
                           transcendentals=B_pad * HID,     # exp in the softmax
                           bytes_accessed=bytes_accessed)

    out = pl.pallas_call(
        net_kernel,
        out_shape=jax.ShapeDtypeStruct((B_pad, HID), jnp.float32),
        grid=grid,
        in_specs=[
            pl.BlockSpec((TB, IN_DIM), lambda i: (i, 0)),                   # x tile
            pl.BlockSpec((IN_DIM, HID), lambda i: (0, 0)),                  # fc1 w, resident
            pl.BlockSpec((N_LAYERS - 1, HID, HID), lambda i: (0, 0, 0)),    # fc2..5 w, resident
            pl.BlockSpec((8, HID), lambda i: (0, 0)),                       # biases, resident
        ],
        out_specs=pl.BlockSpec((TB, HID), lambda i: (i, 0)),
        compiler_params=pltpu.CompilerParams(
            dimension_semantics=("parallel",),   # shard batch tiles across TCs
        ),
        cost_estimate=cost,
    )(x_pad, w1, w_rest, b_slab)

    # TODO(synk): let the consumer fuse this slice (or take the padded slab) to
    # avoid an extra XLA read of the lane-dense output.
    return out[:B, :OUT_DIM]


def init_params(key):
    """nn.Linear-shaped params: fc1(8->32), fc2..fc4(32->32), fc5(32->13).

    Weights stored [in, out] (transpose of PyTorch's (out, in)); biases [out].
    """
    sizes = [(IN_DIM, 32), (32, 32), (32, 32), (32, 32), (32, OUT_DIM)]
    params = []
    for fan_in, fan_out in sizes:
        key, kw, kb = jax.random.split(key, 3)
        bound = 1.0 / jnp.sqrt(jnp.float32(fan_in))
        w = jax.random.uniform(kw, (fan_in, fan_out), jnp.float32, -bound, bound)
        b = jax.random.uniform(kb, (fan_out,), jnp.float32, -bound, bound)
        params.append((w, b))
    return params


def pack_params(params):
    """Pack into bf16 weight slabs + f32 bias slab with the class mask folded in.

    Returns:
      w1:     (8, 128)       bf16  fc1 weights, zero-padded columns
      w_rest: (4, 128, 128)  bf16  fc2..fc5 weights, zero-padded
      b_slab: (8, 128)       f32   biases rows 0..4; row 4 cols 13.. = -1e30 mask
    """
    w1 = jnp.zeros((IN_DIM, HID), jnp.bfloat16)
    w_rest = jnp.zeros((N_LAYERS - 1, HID, HID), jnp.bfloat16)
    b_slab = jnp.zeros((8, HID), jnp.float32)

    w0, b0 = params[0]
    w1 = w1.at[:, :32].set(w0.astype(jnp.bfloat16))
    b_slab = b_slab.at[0, :32].set(b0)

    for li, (w, b) in enumerate(params[1:], start=1):
        fi, fo = w.shape
        w_rest = w_rest.at[li - 1, :fi, :fo].set(w.astype(jnp.bfloat16))
        b_slab = b_slab.at[li, :fo].set(b)

    # Fold the padded-class mask into the fc5 bias (finite => no NaN risk downstream).
    b_slab = b_slab.at[N_LAYERS - 1, OUT_DIM:].set(NEG_MASK)
    return w1, w_rest, b_slab


def reference_forward(x, params, compute_dtype=jnp.float32):
    """Pure-JAX reference.  compute_dtype=bfloat16 emulates the kernel's MXU numerics."""
    h = x
    for (w, b) in params[:-1]:
        z = jnp.dot(h.astype(compute_dtype), w.astype(compute_dtype),
                    preferred_element_type=jnp.float32) + b
        h = jnp.maximum(z, 0.0)
    w5, b5 = params[-1]
    logits = jnp.dot(h.astype(compute_dtype), w5.astype(compute_dtype),
                     preferred_element_type=jnp.float32) + b5
    return jax.nn.log_softmax(logits, axis=1)


if __name__ == "__main__":
    key = jax.random.PRNGKey(0)
    key, kx = jax.random.split(key)

    batch = 4
    x = jax.random.normal(kx, (batch, IN_DIM), jnp.float32)
    params = init_params(key)
    w1, w_rest, b_slab = pack_params(params)

    out = jax.block_until_ready(net_forward(x, w1, w_rest, b_slab))
    assert out.shape == (batch, OUT_DIM)
    ref_bf16 = reference_forward(x, params, compute_dtype=jnp.bfloat16)
    ref_f32 = reference_forward(x, params)
    assert jnp.allclose(out, ref_bf16, atol=1e-3, rtol=1e-3), "mismatch vs bf16-emulated reference"
    assert jnp.allclose(out, ref_f32, atol=5e-2, rtol=5e-2), "mismatch vs f32 reference"

    # Exercise the multi-tile grid path (grid > 1) with a slightly larger batch.
    key, kx2 = jax.random.split(key)
    x2 = jax.random.normal(kx2, (20, IN_DIM), jnp.float32)
    out2 = jax.block_until_ready(net_forward(x2, w1, w_rest, b_slab, block_batch=8))
    assert out2.shape == (20, OUT_DIM)
    ref2_bf16 = reference_forward(x2, params, compute_dtype=jnp.bfloat16)
    assert jnp.allclose(out2, ref2_bf16, atol=1e-3, rtol=1e-3), "mismatch vs bf16 reference (tiled)"

    print("KERNEL_OK")
</pallas_src>

<mosaic_0001>
module attributes {stable_mosaic.version = 11 : i64} {
  func.func @net_kernel(%arg0: i32, %arg1: memref<8x8xf32, #tpu.memory_space<vmem>>, %arg2: memref<8x128xbf16, #tpu.memory_space<vmem>>, %arg3: memref<4x128x128xbf16, #tpu.memory_space<vmem>>, %arg4: memref<8x128xf32, #tpu.memory_space<vmem>>, %arg5: memref<8x128xf32, #tpu.memory_space<vmem>>) attributes {dimension_semantics = [#tpu.dimension_semantics<parallel>], iteration_bounds = array<i64: 1>, scalar_prefetch = 0 : i64, scratch_operands = 0 : i64, tpu.core_type = #tpu.core_type<tc>, window_params = [{transform_indices = @transform_0, window_bounds = array<i64: 8, 8>}, {pipeline_mode = #tpu.pipeline_mode<synchronous>, transform_indices = @transform_1, window_bounds = array<i64: 8, 128>}, {pipeline_mode = #tpu.pipeline_mode<synchronous>, transform_indices = @transform_2, window_bounds = array<i64: 4, 128, 128>}, {pipeline_mode = #tpu.pipeline_mode<synchronous>, transform_indices = @transform_3, window_bounds = array<i64: 8, 128>}, {transform_indices = @transform_4, window_bounds = array<i64: 8, 128>}]} {
    %c0 = arith.constant 0 : index
    %c0_0 = arith.constant 0 : index
    %0 = vector.load %arg4[%c0, %c0_0] : memref<8x128xf32, #tpu.memory_space<vmem>>, vector<8x128xf32>
    %c0_1 = arith.constant 0 : index
    %c0_2 = arith.constant 0 : index
    %1 = vector.load %arg1[%c0_1, %c0_2] : memref<8x8xf32, #tpu.memory_space<vmem>>, vector<8x8xf32>
    %2 = arith.truncf %1 : vector<8x8xf32> to vector<8x8xbf16>
    %c0_3 = arith.constant 0 : index
    %c0_4 = arith.constant 0 : index
    %3 = vector.load %arg2[%c0_3, %c0_4] : memref<8x128xbf16, #tpu.memory_space<vmem>>, vector<8x128xbf16>
    %cst = arith.constant dense<0.000000e+00> : vector<8x128xf32>
    %4 = tpu.matmul %2, %3, %cst {dimension_numbers = #tpu.dot_dimension_numbers<[1], [0], [0], [1], [0, 0, 1, 1], [], []>} : vector<8x8xbf16>, vector<8x128xbf16>, vector<8x128xf32> -> vector<8x128xf32>
    %5 = vector.extract_strided_slice %0 {offsets = [0, 0], sizes = [1, 128], strides = [1, 1]} : vector<8x128xf32> to vector<1x128xf32>
    %6 = vector.broadcast %5 : vector<1x128xf32> to vector<8x128xf32>
    %7 = arith.addf %4, %6 : vector<8x128xf32>
    %cst_5 = arith.constant 0.000000e+00 : f32
    %8 = vector.broadcast %cst_5 : f32 to vector<8x128xf32>
    %9 = arith.maximumf %7, %8 : vector<8x128xf32>
    %10 = arith.truncf %9 : vector<8x128xf32> to vector<8x128xbf16>
    %c0_6 = arith.constant 0 : index
    %c0_7 = arith.constant 0 : index
    %c0_8 = arith.constant 0 : index
    %11 = vector.load %arg3[%c0_6, %c0_7, %c0_8] : memref<4x128x128xbf16, #tpu.memory_space<vmem>>, vector<1x128x128xbf16>
    %12 = vector.shape_cast %11 : vector<1x128x128xbf16> to vector<128x128xbf16>
    %cst_9 = arith.constant dense<0.000000e+00> : vector<8x128xf32>
    %13 = tpu.matmul %10, %12, %cst_9 {dimension_numbers = #tpu.dot_dimension_numbers<[1], [0], [0], [1], [0, 0, 1, 1], [], []>} : vector<8x128xbf16>, vector<128x128xbf16>, vector<8x128xf32> -> vector<8x128xf32>
    %14 = vector.extract_strided_slice %0 {offsets = [1, 0], sizes = [1, 128], strides = [1, 1]} : vector<8x128xf32> to vector<1x128xf32>
    %15 = vector.broadcast %14 : vector<1x128xf32> to vector<8x128xf32>
    %16 = arith.addf %13, %15 : vector<8x128xf32>
    %cst_10 = arith.constant 0.000000e+00 : f32
    %17 = vector.broadcast %cst_10 : f32 to vector<8x128xf32>
    %18 = arith.maximumf %16, %17 : vector<8x128xf32>
    %19 = arith.truncf %18 : vector<8x128xf32> to vector<8x128xbf16>
    %c1 = arith.constant 1 : index
    %c0_11 = arith.constant 0 : index
    %c0_12 = arith.constant 0 : index
    %20 = vector.load %arg3[%c1, %c0_11, %c0_12] : memref<4x128x128xbf16, #tpu.memory_space<vmem>>, vector<1x128x128xbf16>
    %21 = vector.shape_cast %20 : vector<1x128x128xbf16> to vector<128x128xbf16>
    %cst_13 = arith.constant dense<0.000000e+00> : vector<8x128xf32>
    %22 = tpu.matmul %19, %21, %cst_13 {dimension_numbers = #tpu.dot_dimension_numbers<[1], [0], [0], [1], [0, 0, 1, 1], [], []>} : vector<8x128xbf16>, vector<128x128xbf16>, vector<8x128xf32> -> vector<8x128xf32>
    %23 = vector.extract_strided_slice %0 {offsets = [2, 0], sizes = [1, 128], strides = [1, 1]} : vector<8x128xf32> to vector<1x128xf32>
    %24 = vector.broadcast %23 : vector<1x128xf32> to vector<8x128xf32>
    %25 = arith.addf %22, %24 : vector<8x128xf32>
    %cst_14 = arith.constant 0.000000e+00 : f32
    %26 = vector.broadcast %cst_14 : f32 to vector<8x128xf32>
    %27 = arith.maximumf %25, %26 : vector<8x128xf32>
    %28 = arith.truncf %27 : vector<8x128xf32> to vector<8x128xbf16>
    %c2 = arith.constant 2 : index
    %c0_15 = arith.constant 0 : index
    %c0_16 = arith.constant 0 : index
    %29 = vector.load %arg3[%c2, %c0_15, %c0_16] : memref<4x128x128xbf16, #tpu.memory_space<vmem>>, vector<1x128x128xbf16>
    %30 = vector.shape_cast %29 : vector<1x128x128xbf16> to vector<128x128xbf16>
    %cst_17 = arith.constant dense<0.000000e+00> : vector<8x128xf32>
    %31 = tpu.matmul %28, %30, %cst_17 {dimension_numbers = #tpu.dot_dimension_numbers<[1], [0], [0], [1], [0, 0, 1, 1], [], []>} : vector<8x128xbf16>, vector<128x128xbf16>, vector<8x128xf32> -> vector<8x128xf32>
    %32 = vector.extract_strided_slice %0 {offsets = [3, 0], sizes = [1, 128], strides = [1, 1]} : vector<8x128xf32> to vector<1x128xf32>
    %33 = vector.broadcast %32 : vector<1x128xf32> to vector<8x128xf32>
    %34 = arith.addf %31, %33 : vector<8x128xf32>
    %cst_18 = arith.constant 0.000000e+00 : f32
    %35 = vector.broadcast %cst_18 : f32 to vector<8x128xf32>
    %36 = arith.maximumf %34, %35 : vector<8x128xf32>
    %37 = arith.truncf %36 : vector<8x128xf32> to vector<8x128xbf16>
    %c3 = arith.constant 3 : index
    %c0_19 = arith.constant 0 : index
    %c0_20 = arith.constant 0 : index
    %38 = vector.load %arg3[%c3, %c0_19, %c0_20] : memref<4x128x128xbf16, #tpu.memory_space<vmem>>, vector<1x128x128xbf16>
    %39 = vector.shape_cast %38 : vector<1x128x128xbf16> to vector<128x128xbf16>
    %cst_21 = arith.constant dense<0.000000e+00> : vector<8x128xf32>
    %40 = tpu.matmul %37, %39, %cst_21 {dimension_numbers = #tpu.dot_dimension_numbers<[1], [0], [0], [1], [0, 0, 1, 1], [], []>} : vector<8x128xbf16>, vector<128x128xbf16>, vector<8x128xf32> -> vector<8x128xf32>
    %41 = vector.extract_strided_slice %0 {offsets = [4, 0], sizes = [1, 128], strides = [1, 1]} : vector<8x128xf32> to vector<1x128xf32>
    %42 = vector.broadcast %41 : vector<1x128xf32> to vector<8x128xf32>
    %43 = arith.addf %40, %42 : vector<8x128xf32>
    %cst_22 = arith.constant dense<0xFF800000> : vector<8xf32>
    %44 = vector.multi_reduction <maximumf>, %43, %cst_22 [1] : vector<8x128xf32> to vector<8xf32>
    %45 = vector.shape_cast %44 : vector<8xf32> to vector<8x1xf32>
    %46 = vector.broadcast %45 : vector<8x1xf32> to vector<8x128xf32>
    %47 = arith.subf %43, %46 : vector<8x128xf32>
    %48 = math.exp %47 : vector<8x128xf32>
    %cst_23 = arith.constant dense<0.000000e+00> : vector<8xf32>
    %49 = vector.multi_reduction <add>, %48, %cst_23 [1] : vector<8x128xf32> to vector<8xf32>
    %50 = vector.shape_cast %49 : vector<8xf32> to vector<8x1xf32>
    %51 = math.log %50 : vector<8x1xf32>
    %52 = vector.broadcast %51 : vector<8x1xf32> to vector<8x128xf32>
    %53 = arith.subf %47, %52 : vector<8x128xf32>
    %c0_24 = arith.constant 0 : index
    %c0_25 = arith.constant 0 : index
    %54 = vector.load %arg5[%c0_24, %c0_25] : memref<8x128xf32, #tpu.memory_space<vmem>>, vector<8x128xf32>
    tpu.vector_store %arg5[%c0_24, %c0_25], %53 {strides = array<i32>} : memref<8x128xf32, #tpu.memory_space<vmem>>, vector<8x128xf32>,
    return
  }
  func.func @transform_0(%arg0: i32) -> (i32, i32) {
    %c0_i32 = arith.constant 0 : i32
    %c0_i32_0 = arith.constant 0 : i32
    return %arg0, %c0_i32 : i32, i32
  }
  func.func @transform_1(%arg0: i32) -> (i32, i32) {
    %c0_i32 = arith.constant 0 : i32
    %c0_i32_0 = arith.constant 0 : i32
    %c0_i32_1 = arith.constant 0 : i32
    return %c0_i32, %c0_i32_0 : i32, i32
  }
  func.func @transform_2(%arg0: i32) -> (i32, i32, i32) {
    %c0_i32 = arith.constant 0 : i32
    %c0_i32_0 = arith.constant 0 : i32
    %c0_i32_1 = arith.constant 0 : i32
    %c0_i32_2 = arith.constant 0 : i32
    return %c0_i32, %c0_i32_0, %c0_i32_1 : i32, i32, i32
  }
  func.func @transform_3(%arg0: i32) -> (i32, i32) {
    %c0_i32 = arith.constant 0 : i32
    %c0_i32_0 = arith.constant 0 : i32
    %c0_i32_1 = arith.constant 0 : i32
    return %c0_i32, %c0_i32_0 : i32, i32
  }
  func.func @transform_4(%arg0: i32) -> (i32, i32) {
    %c0_i32 = arith.constant 0 : i32
    %c0_i32_0 = arith.constant 0 : i32
    return %arg0, %c0_i32 : i32, i32
  }
}

</mosaic_0001>

<llo_original>
// kernel: tpu_custom_call.1
$region0: #{tpu_custom_call.1}
  #allocation0 [shape = 'u32[]', space=smem, size = 0x4, offset = 0x4, fixed_abs, tag = 'smem constant byte address 0x4 - core index']
  #allocation1 [shape = 'u32[72,128]{1,0:T(1,128)}', space=vmem, size = 0x9000, scoped, tag = 'internal scratch']
  %s0 = inlined_call_operand.hbm [shape: f32[8,8], index: 0, kind: input, shape index: {}]
  %s1 = inlined_call_operand.hbm [shape: bf16[8,128], index: 1, kind: input, shape index: {}]
  %s2 = inlined_call_operand.hbm [shape: bf16[4,128,128], index: 2, kind: input, shape index: {}]
  %s3 = inlined_call_operand.hbm [shape: f32[8,128], index: 3, kind: input, shape index: {}]
  %s4 = inlined_call_operand.hbm [shape: f32[8,128], index: 4, kind: output, shape index: {}]
  %s5 = sld [smem:[#allocation0]]
  $region42: #{tpu_custom_call.1} parent=0
    _
  %s7 = ssub.s32 1, %s5
  %s8 = scalar_select 0, %s7, %s5
  $region1: #{tpu_custom_call.1} parent=0
    #allocation2 [shape = 'u8[4096]{0}', space=vmem, size = 0x1000, scoped, tag = 'input window, operand 0, single buffered']
    #allocation3 [shape = 's32[1]{0}', space=sflag, size = 0x4, scoped, tag = 'scoped memory for tpu_custom_call.1']
    #allocation4 [shape = 's32[1]{0}', space=sflag, size = 0x4, scoped, tag = 'scoped memory for tpu_custom_call.1']
    #allocation5 [shape = 'u8[2048]{0}', space=vmem, size = 0x800, scoped, tag = 'input window, operand 1, single buffered']
    #allocation6 [shape = 's32[1]{0}', space=sflag, size = 0x4, scoped, tag = 'scoped memory for tpu_custom_call.1']
    #allocation7 [shape = 'u8[131072]{0}', space=vmem, size = 0x20000, scoped, tag = 'input window, operand 2, single buffered']
    #allocation8 [shape = 'u8[4096]{0}', space=vmem, size = 0x1000, scoped, tag = 'input window, operand 3, single buffered']
    #allocation9 [shape = 's32[1]{0}', space=sflag, size = 0x4, scoped, tag = 'scoped memory for tpu_custom_call.1']
    #allocation10 [shape = 'u8[4096]{0}', space=vmem, size = 0x1000, scoped, tag = 'output window, operand 0, single buffered']
    %9 = vsyncpa [#allocation3], 0
    %10 = vsyncpa [#allocation6], 0
    %11 = vsyncpa [#allocation9], 0
    %12 = vsyncpa [#allocation4], 0
    // Predicated region
    $region2: #{tpu_custom_call.1} parent=1 // pred_check
      _
    $region3: #{tpu_custom_call.1} parent=1 // pred_check_branch
      %14 = sbr.rel (0) target = $region5
    $region4: #{tpu_custom_call.1} parent=1 // pred_region
      %16 = vsyncadd [#allocation3], 0
      %s18 = sshll.u32 %s0, 4
      %s19 = int_to_ptr.hbm [resolvable:$true] %s18
      %s20 = sshll.u32 [#allocation2], 4
      %s21 = int_to_ptr.vmem [resolvable:$true] %s20
      %23 = dma.hbm_to_vmem [thread:$0]  %s19, 128, %s21, [#allocation3]
    $region5: #{tpu_custom_call.1} parent=1 // pred_fallthru
      _
    // Predicated region
    $region6: #{tpu_custom_call.1} parent=1 // pred_check
      _
    $region7: #{tpu_custom_call.1} parent=1 // pred_check_branch
      %25 = sbr.rel (0) target = $region9
    $region8: #{tpu_custom_call.1} parent=1 // pred_region
      %27 = vsyncadd [#allocation6], 0
      %s29 = sshll.u32 %s1, 4
      %s30 = int_to_ptr.hbm [resolvable:$true] %s29
      %s31 = sshll.u32 [#allocation5], 4
      %s32 = int_to_ptr.vmem [resolvable:$true] %s31
      %34 = dma.hbm_to_vmem [thread:$0]  %s30, 64, %s32, [#allocation6]
    $region9: #{tpu_custom_call.1} parent=1 // pred_fallthru
      _
    // Predicated region
    $region10: #{tpu_custom_call.1} parent=1 // pred_check
      _
    $region11: #{tpu_custom_call.1} parent=1 // pred_check_branch
      %36 = sbr.rel (0) target = $region13
    $region12: #{tpu_custom_call.1} parent=1 // pred_region
      %38 = vsyncadd [#allocation6], 0
      %s39 = sshll.u32 %s2, 4
      %s40 = int_to_ptr.hbm [resolvable:$true] %s39
      %s41 = sshll.u32 [#allocation7], 4
      %s42 = int_to_ptr.vmem [resolvable:$true] %s41
      %47 = dma.hbm_to_vmem [thread:$0]  %s40, 4096, %s42, [#allocation6], 64, 64, 4
    $region13: #{tpu_custom_call.1} parent=1 // pred_fallthru
      _
    // Predicated region
    $region14: #{tpu_custom_call.1} parent=1 // pred_check
      _
    $region15: #{tpu_custom_call.1} parent=1 // pred_check_branch
      %49 = sbr.rel (0) target = $region17
    $region16: #{tpu_custom_call.1} parent=1 // pred_region
      %51 = vsyncadd [#allocation9], 0
      %s53 = sshll.u32 %s3, 4
      %s54 = int_to_ptr.hbm [resolvable:$true] %s53
      %s55 = sshll.u32 [#allocation8], 4
      %s56 = int_to_ptr.vmem [resolvable:$true] %s55
      %58 = dma.hbm_to_vmem [thread:$0]  %s54, 128, %s56, [#allocation9]
    $region17: #{tpu_custom_call.1} parent=1 // pred_fallthru
      _
    // Predicated region
    $region18: #{tpu_custom_call.1} parent=1 // pred_check
      _
    $region19: #{tpu_custom_call.1} parent=1 // pred_check_branch
      %60 = sbr.rel (0) target = $region21
    $region20: #{tpu_custom_call.1} parent=1 // pred_region
      %62 = dma.done [#allocation3], 128
    $region21: #{tpu_custom_call.1} parent=1 // pred_fallthru
      _
    // Predicated region
    $region22: #{tpu_custom_call.1} parent=1 // pred_check
      _
    $region23: #{tpu_custom_call.1} parent=1 // pred_check_branch
      %64 = sbr.rel (0) target = $region25
    $region24: #{tpu_custom_call.1} parent=1 // pred_region
      %66 = dma.done [#allocation6], 64
    $region25: #{tpu_custom_call.1} parent=1 // pred_fallthru
      _
    // Predicated region
    $region26: #{tpu_custom_call.1} parent=1 // pred_check
      _
    $region27: #{tpu_custom_call.1} parent=1 // pred_check_branch
      %68 = sbr.rel (0) target = $region29
    $region28: #{tpu_custom_call.1} parent=1 // pred_region
      %70 = dma.done [#allocation6], 4096
    $region29: #{tpu_custom_call.1} parent=1 // pred_fallthru
      _
    // Predicated region
    $region30: #{tpu_custom_call.1} parent=1 // pred_check
      _
    $region31: #{tpu_custom_call.1} parent=1 // pred_check_branch
      %72 = sbr.rel (0) target = $region33
    $region32: #{tpu_custom_call.1} parent=1 // pred_region
      %74 = dma.done [#allocation9], 128
    $region33: #{tpu_custom_call.1} parent=1 // pred_fallthru
      _
    %v76 = vld [vmem:[#allocation8] sm:$0xff]
    %v77 = vld [vmem:[#allocation2] sm:$0xff]
    %v78 = vpack.c.bf16 %v77, %v77
    %v79 = vld [vmem:[#allocation5] sm:$0xf]
    %v80 = vperm.slane %v76, 0
    %vm81 = vcmask 64512
    %v83 = vsel %vm81, %v78, 0
    %vm85 = vcmask 1043456
    %v87 = vsel %vm85, %v79, 0
    %89 = vmatpush.bf16.msra.mxu0 0
    %90 = vmatpush.bf16.msra.mxu0 0
    %91 = vmatpush.bf16.msra.mxu0 0
    %92 = vmatpush.bf16.msra.mxu0 0
    %93 = vmatpush.bf16.msra.mxu0 0
    %94 = vmatpush.bf16.msra.mxu0 0
    %95 = vmatpush.bf16.msra.mxu0 0
    %96 = vmatpush.bf16.msra.mxu0 %v87
    %97 = vmatmul.bf16.gmra.mxu0 %v83
    %v98 = vpop.f32.mrf.mxu0
    %v99 = vadd.f32 %v80, %v98
    %v100 = vpop.f32.mrf.mxu0
    %101 = vdwg.mxu0
    %v102 = vmax.f32 %v99, 0.0
    %v103 = vpack.c.bf16 %v102, %v102
    %v104 = vld [vmem:[#allocation7] sm:$0xf]
    %v105 = vld [vmem:[#allocation7 + $0x4] sm:$0xf]
    %v106 = vld [vmem:[#allocation7 + $0x8] sm:$0xf]
    %v107 = vld [vmem:[#allocation7 + $0xc] sm:$0xf]
    %v108 = vld [vmem:[#allocation7 + $0x10] sm:$0xf]
    %v109 = vld [vmem:[#allocation7 + $0x14] sm:$0xf]
    %v110 = vld [vmem:[#allocation7 + $0x18] sm:$0xf]
    %v111 = vld [vmem:[#allocation7 + $0x1c] sm:$0xf]
    %v112 = vld [vmem:[#allocation7 + $0x20] sm:$0xf]
    %v113 = vld [vmem:[#allocation7 + $0x24] sm:$0xf]
    %v114 = vld [vmem:[#allocation7 + $0x28] sm:$0xf]
    %v115 = vld [vmem:[#allocation7 + $0x2c] sm:$0xf]
    %v116 = vld [vmem:[#allocation7 + $0x30] sm:$0xf]
    %v117 = vld [vmem:[#allocation7 + $0x34] sm:$0xf]
    %v118 = vld [vmem:[#allocation7 + $0x38] sm:$0xf]
    %v119 = vld [vmem:[#allocation7 + $0x3c] sm:$0xf]
    %v120 = vperm.slane %v76, 1
    %v137 = vunpack.c.l.b16 %v104
    %v138 = vunpack.c.l.b16 %v105
    %v139 = vunpack.c.l.b16 %v106
    %v140 = vunpack.c.l.b16 %v107
    %v141 = vunpack.c.l.b16 %v108
    %v142 = vunpack.c.l.b16 %v109
    %v143 = vunpack.c.l.b16 %v110
    %v144 = vunpack.c.l.b16 %v111
    %v145 = vunpack.c.l.b16 %v112
    %v146 = vunpack.c.l.b16 %v113
    %v147 = vunpack.c.l.b16 %v114
    %v148 = vunpack.c.l.b16 %v115
    %v149 = vunpack.c.l.b16 %v116
    %v150 = vunpack.c.l.b16 %v117
    %v151 = vunpack.c.l.b16 %v118
    %v152 = vunpack.c.l.b16 %v119
    %v153 = vpack.c.b16 %v138, %v137
    %v154 = vpack.c.b16 %v140, %v139
    %v155 = vpack.c.b16 %v142, %v141
    %v156 = vpack.c.b16 %v144, %v143
    %v157 = vpack.c.b16 %v146, %v145
    %v158 = vpack.c.b16 %v148, %v147
    %v159 = vpack.c.b16 %v150, %v149
    %v160 = vpack.c.b16 %v152, %v151
    %169 = vmatpush.bf16.msra.mxu0 %v160
    %170 = vmatpush.bf16.msra.mxu0 %v159
    %171 = vmatpush.bf16.msra.mxu0 %v158
    %172 = vmatpush.bf16.msra.mxu0 %v157
    %173 = vmatpush.bf16.msra.mxu0 %v156
    %174 = vmatpush.bf16.msra.mxu0 %v155
    %175 = vmatpush.bf16.msra.mxu0 %v154
    %176 = vmatpush.bf16.msra.mxu0 %v153
    %177 = vmatmul.bf16.gmra.mxu0 %v103
    %v178 = vpop.f32.mrf.mxu0
    %v179 = vadd.f32 %v120, %v178
    %v180 = vpop.f32.mrf.mxu0
    %181 = vdwg.mxu0
    %v182 = vmax.f32 %v179, 0.0
    %v183 = vpack.c.bf16 %v182, %v182
    %s184 = scalar_lea.vmem [#allocation7], 64
    %v185 = vld [vmem:[%s184] sm:$0xf]
    %v186 = vld [vmem:[%s184 + $0x4] sm:$0xf]
    %v187 = vld [vmem:[%s184 + $0x8] sm:$0xf]
    %v188 = vld [vmem:[%s184 + $0xc] sm:$0xf]
    %v189 = vld [vmem:[%s184 + $0x10] sm:$0xf]
    %v190 = vld [vmem:[%s184 + $0x14] sm:$0xf]
    %v191 = vld [vmem:[%s184 + $0x18] sm:$0xf]
    %v192 = vld [vmem:[%s184 + $0x1c] sm:$0xf]
    %v193 = vld [vmem:[%s184 + $0x20] sm:$0xf]
    %v194 = vld [vmem:[%s184 + $0x24] sm:$0xf]
    %v195 = vld [vmem:[%s184 + $0x28] sm:$0xf]
    %v196 = vld [vmem:[%s184 + $0x2c] sm:$0xf]
    %v197 = vld [vmem:[%s184 + $0x30] sm:$0xf]
    %v198 = vld [vmem:[%s184 + $0x34] sm:$0xf]
    %v199 = vld [vmem:[%s184 + $0x38] sm:$0xf]
    %v200 = vld [vmem:[%s184 + $0x3c] sm:$0xf]
    %v201 = vperm.slane %v76, 2
    %v218 = vunpack.c.l.b16 %v185
    %v219 = vunpack.c.l.b16 %v186
    %v220 = vunpack.c.l.b16 %v187
    %v221 = vunpack.c.l.b16 %v188
    %v222 = vunpack.c.l.b16 %v189
    %v223 = vunpack.c.l.b16 %v190
    %v224 = vunpack.c.l.b16 %v191
    %v225 = vunpack.c.l.b16 %v192
    %v226 = vunpack.c.l.b16 %v193
    %v227 = vunpack.c.l.b16 %v194
    %v228 = vunpack.c.l.b16 %v195
    %v229 = vunpack.c.l.b16 %v196
    %v230 = vunpack.c.l.b16 %v197
    %v231 = vunpack.c.l.b16 %v198
    %v232 = vunpack.c.l.b16 %v199
    %v233 = vunpack.c.l.b16 %v200
    %v234 = vpack.c.b16 %v219, %v218
    %v235 = vpack.c.b16 %v221, %v220
    %v236 = vpack.c.b16 %v223, %v222
    %v237 = vpack.c.b16 %v225, %v224
    %v238 = vpack.c.b16 %v227, %v226
    %v239 = vpack.c.b16 %v229, %v228
    %v240 = vpack.c.b16 %v231, %v230
    %v241 = vpack.c.b16 %v233, %v232
    %250 = vmatpush.bf16.msra.mxu0 %v241
    %251 = vmatpush.bf16.msra.mxu0 %v240
    %252 = vmatpush.bf16.msra.mxu0 %v239
    %253 = vmatpush.bf16.msra.mxu0 %v238
    %254 = vmatpush.bf16.msra.mxu0 %v237
    %255 = vmatpush.bf16.msra.mxu0 %v236
    %256 = vmatpush.bf16.msra.mxu0 %v235
    %257 = vmatpush.bf16.msra.mxu0 %v234
    %258 = vmatmul.bf16.gmra.mxu0 %v183
    %v259 = vpop.f32.mrf.mxu0
    %v260 = vadd.f32 %v201, %v259
    %v261 = vpop.f32.mrf.mxu0
    %262 = vdwg.mxu0
    %v263 = vmax.f32 %v260, 0.0
    %v264 = vpack.c.bf16 %v263, %v263
    %s265 = scalar_lea.vmem [#allocation7], 128
    %v266 = vld [vmem:[%s265] sm:$0xf]
    %v267 = vld [vmem:[%s265 + $0x4] sm:$0xf]
    %v268 = vld [vmem:[%s265 + $0x8] sm:$0xf]
    %v269 = vld [vmem:[%s265 + $0xc] sm:$0xf]
    %v270 = vld [vmem:[%s265 + $0x10] sm:$0xf]
    %v271 = vld [vmem:[%s265 + $0x14] sm:$0xf]
    %v272 = vld [vmem:[%s265 + $0x18] sm:$0xf]
    %v273 = vld [vmem:[%s265 + $0x1c] sm:$0xf]
    %v274 = vld [vmem:[%s265 + $0x20] sm:$0xf]
    %v275 = vld [vmem:[%s265 + $0x24] sm:$0xf]
    %v276 = vld [vmem:[%s265 + $0x28] sm:$0xf]
    %v277 = vld [vmem:[%s265 + $0x2c] sm:$0xf]
    %v278 = vld [vmem:[%s265 + $0x30] sm:$0xf]
    %v279 = vld [vmem:[%s265 + $0x34] sm:$0xf]
    %v280 = vld [vmem:[%s265 + $0x38] sm:$0xf]
    %v281 = vld [vmem:[%s265 + $0x3c] sm:$0xf]
    %v282 = vperm.slane %v76, 3
    %v299 = vunpack.c.l.b16 %v266
    %v300 = vunpack.c.l.b16 %v267
    %v301 = vunpack.c.l.b16 %v268
    %v302 = vunpack.c.l.b16 %v269
    %v303 = vunpack.c.l.b16 %v270
    %v304 = vunpack.c.l.b16 %v271
    %v305 = vunpack.c.l.b16 %v272
    %v306 = vunpack.c.l.b16 %v273
    %v307 = vunpack.c.l.b16 %v274
    %v308 = vunpack.c.l.b16 %v275
    %v309 = vunpack.c.l.b16 %v276
    %v310 = vunpack.c.l.b16 %v277
    %v311 = vunpack.c.l.b16 %v278
    %v312 = vunpack.c.l.b16 %v279
    %v313 = vunpack.c.l.b16 %v280
    %v314 = vunpack.c.l.b16 %v281
    %v315 = vpack.c.b16 %v300, %v299
    %v316 = vpack.c.b16 %v302, %v301
    %v317 = vpack.c.b16 %v304, %v303
    %v318 = vpack.c.b16 %v306, %v305
    %v319 = vpack.c.b16 %v308, %v307
    %v320 = vpack.c.b16 %v310, %v309
    %v321 = vpack.c.b16 %v312, %v311
    %v322 = vpack.c.b16 %v314, %v313
    %331 = vmatpush.bf16.msra.mxu0 %v322
    %332 = vmatpush.bf16.msra.mxu0 %v321
    %333 = vmatpush.bf16.msra.mxu0 %v320
    %334 = vmatpush.bf16.msra.mxu0 %v319
    %335 = vmatpush.bf16.msra.mxu0 %v318
    %336 = vmatpush.bf16.msra.mxu0 %v317
    %337 = vmatpush.bf16.msra.mxu0 %v316
    %338 = vmatpush.bf16.msra.mxu0 %v315
    %339 = vmatmul.bf16.gmra.mxu0 %v264
    %v340 = vpop.f32.mrf.mxu0
    %v341 = vadd.f32 %v282, %v340
    %v342 = vpop.f32.mrf.mxu0
    %343 = vdwg.mxu0
    %v344 = vmax.f32 %v341, 0.0
    %v345 = vpack.c.bf16 %v344, %v344
    %s346 = scalar_lea.vmem [#allocation7], 192
    %v347 = vld [vmem:[%s346] sm:$0xf]
    %v348 = vld [vmem:[%s346 + $0x4] sm:$0xf]
    %v349 = vld [vmem:[%s346 + $0x8] sm:$0xf]
    %v350 = vld [vmem:[%s346 + $0xc] sm:$0xf]
    %v351 = vld [vmem:[%s346 + $0x10] sm:$0xf]
    %v352 = vld [vmem:[%s346 + $0x14] sm:$0xf]
    %v353 = vld [vmem:[%s346 + $0x18] sm:$0xf]
    %v354 = vld [vmem:[%s346 + $0x1c] sm:$0xf]
    %v355 = vld [vmem:[%s346 + $0x20] sm:$0xf]
    %v356 = vld [vmem:[%s346 + $0x24] sm:$0xf]
    %v357 = vld [vmem:[%s346 + $0x28] sm:$0xf]
    %v358 = vld [vmem:[%s346 + $0x2c] sm:$0xf]
    %v359 = vld [vmem:[%s346 + $0x30] sm:$0xf]
    %v360 = vld [vmem:[%s346 + $0x34] sm:$0xf]
    %v361 = vld [vmem:[%s346 + $0x38] sm:$0xf]
    %v362 = vld [vmem:[%s346 + $0x3c] sm:$0xf]
    %v363 = vperm.slane %v76, 4
    %v380 = vunpack.c.l.b16 %v347
    %v381 = vunpack.c.l.b16 %v348
    %v382 = vunpack.c.l.b16 %v349
    %v383 = vunpack.c.l.b16 %v350
    %v384 = vunpack.c.l.b16 %v351
    %v385 = vunpack.c.l.b16 %v352
    %v386 = vunpack.c.l.b16 %v353
    %v387 = vunpack.c.l.b16 %v354
    %v388 = vunpack.c.l.b16 %v355
    %v389 = vunpack.c.l.b16 %v356
    %v390 = vunpack.c.l.b16 %v357
    %v391 = vunpack.c.l.b16 %v358
    %v392 = vunpack.c.l.b16 %v359
    %v393 = vunpack.c.l.b16 %v360
    %v394 = vunpack.c.l.b16 %v361
    %v395 = vunpack.c.l.b16 %v362
    %v396 = vpack.c.b16 %v381, %v380
    %v397 = vpack.c.b16 %v383, %v382
    %v398 = vpack.c.b16 %v385, %v384
    %v399 = vpack.c.b16 %v387, %v386
    %v400 = vpack.c.b16 %v389, %v388
    %v401 = vpack.c.b16 %v391, %v390
    %v402 = vpack.c.b16 %v393, %v392
    %v403 = vpack.c.b16 %v395, %v394
    %412 = vmatpush.bf16.msra.mxu0 %v403
    %413 = vmatpush.bf16.msra.mxu0 %v402
    %414 = vmatpush.bf16.msra.mxu0 %v401
    %415 = vmatpush.bf16.msra.mxu0 %v400
    %416 = vmatpush.bf16.msra.mxu0 %v399
    %417 = vmatpush.bf16.msra.mxu0 %v398
    %418 = vmatpush.bf16.msra.mxu0 %v397
    %419 = vmatpush.bf16.msra.mxu0 %v396
    %420 = vmatmul.bf16.gmra.mxu0 %v345
    %v421 = vpop.f32.mrf.mxu0
    %v422 = vadd.f32 %v363, %v421
    %v423 = vpop.f32.mrf.mxu0
    %424 = vdwg.mxu0
    %425 = vmax.xlane.f32.xlu0 %v422
    %v426 = vpop.xlane.xlu0 %425
    %v427 = vsub.f32 %v422, %v426
    %v428 = vmul.f32 %v427, 1.442695
    %v429 = vpow.pop %v428
    %430 = vadd.xlane.f32.xlu0 %v429
    %v431 = vpop.xlane.xlu0 %430
    %v432 = vlog2.pop %v431
    %v433 = vmul.f32 %v432, 0.6931472
    %v434 = vsub.f32 %v427, %v433
    %435 = vst [vmem:[#allocation10] sm:$0xff] %v434
    // Predicated region
    $region34: #{tpu_custom_call.1} parent=1 // pred_check
      _
    $region35: #{tpu_custom_call.1} parent=1 // pred_check_branch
      %437 = sbr.rel (0) target = $region37
    $region36: #{tpu_custom_call.1} parent=1 // pred_region
      %439 = vsyncadd [#allocation4], 0
      %s441 = sshll.u32 [#allocation10], 4
      %s442 = int_to_ptr.vmem [resolvable:$true] %s441
      %s443 = sshll.u32 %s4, 4
      %s444 = int_to_ptr.hbm [resolvable:$true] %s443
      %446 = dma.vmem_to_hbm [thread:$0]  %s442, 128, %s444, [#allocation4]
    $region37: #{tpu_custom_call.1} parent=1 // pred_fallthru
      _
    // Predicated region
    $region38: #{tpu_custom_call.1} parent=1 // pred_check
      _
    $region39: #{tpu_custom_call.1} parent=1 // pred_check_branch
      %448 = sbr.rel (0) target = $region41
    $region40: #{tpu_custom_call.1} parent=1 // pred_region
      %450 = dma.done [#allocation4], 128
    $region41: #{tpu_custom_call.1} parent=1 // pred_fallthru
      _
    %451 = vsyncpa [#allocation3], 1
    %452 = vsyncpa [#allocation6], 1
    %453 = vsyncpa [#allocation9], 1
    %454 = vsyncpa [#allocation4], 1

</llo_original>
